<compile_context>
chip_gen: v7x
topology: tpu7x:2x2x1
jax: 0.10.0
libtpu: 0.0.40
codegen_flags: <defaults>
</compile_context>

<pallas_src>
import functools

import jax
import jax.numpy as jnp
from jax.experimental import pallas as pl
from jax.experimental.pallas import tpu as pltpu


def _round_up(x: int, m: int) -> int:
    return ((x + m - 1) // m) * m


def _round_down(x: int, m: int) -> int:
    return (x // m) * m


def _cross_entropy_kernel(logits_ref, targets_ref, loss_ref,
                          m_ref, s_ref, t_ref, *,
                          num_c_blocks: int, num_valid_last: int):
    """One (TILE_N, TILE_C) tile of the online-logsumexp cross-entropy sweep."""
    c_idx = pl.program_id(1)
    tn, tc = logits_ref.shape

    @pl.when(c_idx == 0)
    def _init():
        m_ref[...] = jnp.full((tn, 1), -jnp.inf, dtype=jnp.float32)
        s_ref[...] = jnp.zeros((tn, 1), dtype=jnp.float32)
        t_ref[...] = jnp.zeros((tn, 1), dtype=jnp.float32)

    logits = logits_ref[...].astype(jnp.float32)                    # (tn, tc), cast per tile
    local_col = jax.lax.broadcasted_iota(jnp.int32, (tn, tc), 1)    # loop-invariant constant
    tgt_local = targets_ref[...] - c_idx * tc                       # (tn, 1) int32

    # Target-logit gather. Targets are always < num_classes, so the match lane is always a
    # valid lane even on the ragged tile; the jnp.where SELECT keeps unspecified OOB lane
    # data (possibly NaN/Inf) from propagating.
    t_ref[...] += jnp.sum(jnp.where(local_col == tgt_local, logits, 0.0),
                          axis=-1, keepdims=True)

    def _fast_update():
        # Fully-valid interior tile: no mask iota, no selects.
        tile_max = jnp.max(logits, axis=-1, keepdims=True)
        m_prev = m_ref[...]
        m_new = jnp.maximum(m_prev, tile_max)
        p_sum = jnp.sum(jnp.exp(logits - m_new), axis=-1, keepdims=True)
        s_ref[...] = jnp.exp(m_prev - m_new) * s_ref[...] + p_sum   # alpha==0 on first tile
        m_ref[...] = m_new

    def _ragged_update():
        # Last (ragged) class tile: select-mask the padded class tail / OOB lanes.
        valid = local_col < num_valid_last
        masked = jnp.where(valid, logits, -jnp.inf)
        tile_max = jnp.max(masked, axis=-1, keepdims=True)          # finite: >=1 valid lane
        m_prev = m_ref[...]
        m_new = jnp.maximum(m_prev, tile_max)
        p = jnp.where(valid, jnp.exp(logits - m_new), 0.0)
        s_ref[...] = jnp.exp(m_prev - m_new) * s_ref[...] + jnp.sum(p, axis=-1, keepdims=True)
        m_ref[...] = m_new

    last_tile_ragged = num_valid_last < tc                          # static
    if not last_tile_ragged:
        _fast_update()                                              # no masking anywhere
    elif num_c_blocks == 1:
        _ragged_update()                                            # single ragged tile
    else:
        is_last = c_idx == num_c_blocks - 1
        pl.when(jnp.logical_not(is_last))(_fast_update)
        pl.when(is_last)(_ragged_update)

    @pl.when(c_idx == num_c_blocks - 1)
    def _finalize():
        loss_ref[...] = (m_ref[...] + jnp.log(s_ref[...]) - t_ref[...]
                         ).astype(loss_ref.dtype)


def cross_entropy_loss(predicted: jax.Array, actual: jax.Array,
                       *, tile_n: int = 256, tile_c: int = 2048) -> jax.Array:
    """Pallas equivalent of Criterion(loss_function='cross_entropy', reduction='mean').

    predicted: (N, C) float logits (any float dtype; streamed natively, cast in-kernel)
    actual:    (N,) integer class indices
    returns:   scalar float32 mean cross-entropy
    """
    n, c = predicted.shape
    itemsize = jnp.dtype(predicted.dtype).itemsize
    sub = 8 * max(1, 4 // itemsize)          # sublane multiple: 8 (f32), 16 (bf16), 32 (8-bit)

    # Class tile: lane-dense multiple of 128. No wrapper-side padding — ragged C tail is
    # masked in-kernel; ragged grid edges read unspecified data which the masks discard.
    tc = min(_round_up(tile_c, 128), _round_up(c, 128))

    # Batch tile: multiple of the sublane packing; shrink so the "parallel" batch axis has
    # >= ~4 blocks (megacore / v7x 2-TC load balance) when N is small relative to tile_n.
    tn = min(_round_up(tile_n, sub), _round_up(n, sub))
    if n // 4 >= sub:
        tn = min(tn, max(sub, _round_down(n // 4, sub)))

    num_n_blocks = pl.cdiv(n, tn)
    num_c_blocks = pl.cdiv(c, tc)
    num_valid_last = c - (num_c_blocks - 1) * tc

    targets = actual.astype(jnp.int32).reshape(n, 1)

    per_row = pl.pallas_call(
        functools.partial(_cross_entropy_kernel,
                          num_c_blocks=num_c_blocks,
                          num_valid_last=num_valid_last),
        out_shape=jax.ShapeDtypeStruct((n, 1), jnp.float32),
        grid_spec=pltpu.PrefetchScalarGridSpec(
            num_scalar_prefetch=0,
            grid=(num_n_blocks, num_c_blocks),
            in_specs=[
                pl.BlockSpec((tn, tc), lambda i, j: (i, j)),   # logits tile (native dtype)
                pl.BlockSpec((tn, 1), lambda i, j: (i, 0)),    # targets tile (per N block)
            ],
            out_specs=pl.BlockSpec((tn, 1), lambda i, j: (i, 0)),
            scratch_shapes=[
                pltpu.VMEM((tn, 1), jnp.float32),  # running max
                pltpu.VMEM((tn, 1), jnp.float32),  # running exp-sum
                pltpu.VMEM((tn, 1), jnp.float32),  # target-logit accumulator
            ],
        ),
        compiler_params=pltpu.CompilerParams(
            dimension_semantics=("parallel", "arbitrary"),
            vmem_limit_bytes=48 * 1024 * 1024,     # headroom under v7x 64 MiB physical VMEM
        ),
    )(predicted, targets)

    # reduction='mean' over the batch rows (tiny reduction; kept outside the kernel so the
    # batch grid axis stays fully parallel).
    return jnp.sum(per_row[:, 0]) / jnp.float32(n)


def _reference_cross_entropy(predicted, actual):
    # Pure-JAX reference (mirrors torch.nn.CrossEntropyLoss(reduction='mean')).
    logits = predicted.astype(jnp.float32)
    lse = jax.scipy.special.logsumexp(logits, axis=-1)
    tgt = jnp.take_along_axis(logits, actual[:, None].astype(jnp.int32), axis=-1)[:, 0]
    return jnp.mean(lse - tgt)


if __name__ == "__main__":
    key = jax.random.PRNGKey(0)
    k1, k2, k3, k4, k5, k6 = jax.random.split(key, 6)

    # Case 1: small single-block shapes (batch=8, classes=32) — single ragged C tile.
    N, C = 8, 32
    predicted = jax.random.normal(k1, (N, C), dtype=jnp.float32)
    actual = jax.random.randint(k2, (N,), 0, C, dtype=jnp.int32)
    loss = jax.block_until_ready(cross_entropy_loss(predicted, actual))
    ref = _reference_cross_entropy(predicted, actual)
    assert jnp.allclose(loss, ref, atol=1e-5, rtol=1e-5), (loss, ref)

    # Case 2: multi-block grid with ragged N tail (30 rows / tn=8) and ragged C tail
    # (200 classes / tc=128) — exercises both the interior fast path and the masked path.
    N2, C2 = 30, 200
    predicted2 = jax.random.normal(k3, (N2, C2), dtype=jnp.float32)
    actual2 = jax.random.randint(k4, (N2,), 0, C2, dtype=jnp.int32)
    loss2 = jax.block_until_ready(
        cross_entropy_loss(predicted2, actual2, tile_n=8, tile_c=128))
    ref2 = _reference_cross_entropy(predicted2, actual2)
    assert jnp.allclose(loss2, ref2, atol=1e-5, rtol=1e-5), (loss2, ref2)

    # Case 3: bf16 logits, evenly tiled — exercises the unmasked fast path + native-dtype
    # streaming with in-kernel f32 cast.
    N3, C3 = 48, 384
    predicted3 = jax.random.normal(k5, (N3, C3), dtype=jnp.bfloat16)
    actual3 = jax.random.randint(k6, (N3,), 0, C3, dtype=jnp.int32)
    loss3 = jax.block_until_ready(cross_entropy_loss(predicted3, actual3))
    ref3 = _reference_cross_entropy(predicted3, actual3)
    assert jnp.allclose(loss3, ref3, atol=1e-4, rtol=1e-4), (loss3, ref3)

    print("KERNEL_OK")
</pallas_src>

<mosaic_0001>
module attributes {stable_mosaic.version = 11 : i64} {
  func.func @_cross_entropy_kernel(%arg0: i32, %arg1: i32, %arg2: memref<8x128xf32, #tpu.memory_space<vmem>>, %arg3: memref<8x1xi32, #tpu.memory_space<vmem>>, %arg4: memref<8x1xf32, #tpu.memory_space<vmem>>, %arg5: memref<8x1xf32, #tpu.memory_space<vmem>>, %arg6: memref<8x1xf32, #tpu.memory_space<vmem>>, %arg7: memref<8x1xf32, #tpu.memory_space<vmem>>) attributes {dimension_semantics = [#tpu.dimension_semantics<parallel>, #tpu.dimension_semantics<arbitrary>], iteration_bounds = array<i64: 1, 1>, scalar_prefetch = 0 : i64, scratch_operands = 3 : i64, tpu.core_type = #tpu.core_type<tc>, window_params = [{transform_indices = @transform_0, window_bounds = array<i64: 8, 128>}, {transform_indices = @transform_1, window_bounds = array<i64: 8, 1>}, {transform_indices = @transform_2, window_bounds = array<i64: 8, 1>}]} {
    %c0_i32 = arith.constant 0 : i32
    %0 = arith.cmpi eq, %arg1, %c0_i32 : i32
    %1 = arith.extui %0 : i1 to i32
    %c0_i32_0 = arith.constant 0 : i32
    %2 = arith.cmpi ne, %1, %c0_i32_0 : i32
    scf.if %2 {
      %cst_23 = arith.constant 0xFF800000 : f32
      %43 = vector.broadcast %cst_23 : f32 to vector<8x1xf32>
      %c0_24 = arith.constant 0 : index
      %c0_25 = arith.constant 0 : index
      %44 = vector.load %arg5[%c0_24, %c0_25] : memref<8x1xf32, #tpu.memory_space<vmem>>, vector<8x1xf32>
      tpu.vector_store %arg5[%c0_24, %c0_25], %43 {strides = array<i32>} : memref<8x1xf32, #tpu.memory_space<vmem>>, vector<8x1xf32>,
      %cst_26 = arith.constant 0.000000e+00 : f32
      %45 = vector.broadcast %cst_26 : f32 to vector<8x1xf32>
      %c0_27 = arith.constant 0 : index
      %c0_28 = arith.constant 0 : index
      %46 = vector.load %arg6[%c0_27, %c0_28] : memref<8x1xf32, #tpu.memory_space<vmem>>, vector<8x1xf32>
      tpu.vector_store %arg6[%c0_27, %c0_28], %45 {strides = array<i32>} : memref<8x1xf32, #tpu.memory_space<vmem>>, vector<8x1xf32>,
      %cst_29 = arith.constant 0.000000e+00 : f32
      %47 = vector.broadcast %cst_29 : f32 to vector<8x1xf32>
      %c0_30 = arith.constant 0 : index
      %c0_31 = arith.constant 0 : index
      %48 = vector.load %arg7[%c0_30, %c0_31] : memref<8x1xf32, #tpu.memory_space<vmem>>, vector<8x1xf32>
      tpu.vector_store %arg7[%c0_30, %c0_31], %47 {strides = array<i32>} : memref<8x1xf32, #tpu.memory_space<vmem>>, vector<8x1xf32>,
    } else {
    }
    %c0 = arith.constant 0 : index
    %c0_1 = arith.constant 0 : index
    %3 = vector.load %arg2[%c0, %c0_1] : memref<8x128xf32, #tpu.memory_space<vmem>>, vector<8x128xf32>
    %4 = tpu.iota {dimensions = array<i32: 1>} : vector<8x128xi32>
    %c0_2 = arith.constant 0 : index
    %c0_3 = arith.constant 0 : index
    %5 = vector.load %arg3[%c0_2, %c0_3] : memref<8x1xi32, #tpu.memory_space<vmem>>, vector<8x1xi32>
    %c128_i32 = arith.constant 128 : i32
    %6 = arith.muli %arg1, %c128_i32 : i32
    %7 = vector.broadcast %6 : i32 to vector<8x1xi32>
    %8 = arith.subi %5, %7 : vector<8x1xi32>
    %c0_4 = arith.constant 0 : index
    %c0_5 = arith.constant 0 : index
    %9 = vector.load %arg7[%c0_4, %c0_5] : memref<8x1xf32, #tpu.memory_space<vmem>>, vector<8x1xf32>
    %10 = vector.broadcast %8 : vector<8x1xi32> to vector<8x128xi32>
    %11 = arith.cmpi eq, %4, %10 : vector<8x128xi32>
    %cst = arith.constant 0.000000e+00 : f32
    %12 = vector.broadcast %cst : f32 to vector<8x128xf32>
    %13 = arith.select %11, %3, %12 : vector<8x128xi1>, vector<8x128xf32>
    %cst_6 = arith.constant dense<0.000000e+00> : vector<8xf32>
    %14 = vector.multi_reduction <add>, %13, %cst_6 [1] : vector<8x128xf32> to vector<8xf32>
    %15 = vector.shape_cast %14 : vector<8xf32> to vector<8x1xf32>
    %16 = arith.addf %9, %15 : vector<8x1xf32>
    %c0_7 = arith.constant 0 : index
    %c0_8 = arith.constant 0 : index
    %17 = vector.load %arg7[%c0_7, %c0_8] : memref<8x1xf32, #tpu.memory_space<vmem>>, vector<8x1xf32>
    tpu.vector_store %arg7[%c0_7, %c0_8], %16 {strides = array<i32>} : memref<8x1xf32, #tpu.memory_space<vmem>>, vector<8x1xf32>,
    %c32_i32 = arith.constant 32 : i32
    %18 = vector.broadcast %c32_i32 : i32 to vector<8x128xi32>
    %19 = arith.cmpi slt, %4, %18 : vector<8x128xi32>
    %cst_9 = arith.constant 0xFF800000 : f32
    %20 = vector.broadcast %cst_9 : f32 to vector<8x128xf32>
    %21 = arith.select %19, %3, %20 : vector<8x128xi1>, vector<8x128xf32>
    %cst_10 = arith.constant dense<0xFF800000> : vector<8xf32>
    %22 = vector.multi_reduction <maximumf>, %21, %cst_10 [1] : vector<8x128xf32> to vector<8xf32>
    %23 = vector.shape_cast %22 : vector<8xf32> to vector<8x1xf32>
    %c0_11 = arith.constant 0 : index
    %c0_12 = arith.constant 0 : index
    %24 = vector.load %arg5[%c0_11, %c0_12] : memref<8x1xf32, #tpu.memory_space<vmem>>, vector<8x1xf32>
    %25 = arith.maximumf %24, %23 : vector<8x1xf32>
    %26 = vector.broadcast %25 : vector<8x1xf32> to vector<8x128xf32>
    %27 = arith.subf %3, %26 : vector<8x128xf32>
    %28 = math.exp %27 : vector<8x128xf32>
    %cst_13 = arith.constant 0.000000e+00 : f32
    %29 = vector.broadcast %cst_13 : f32 to vector<8x128xf32>
    %30 = arith.select %19, %28, %29 : vector<8x128xi1>, vector<8x128xf32>
    %31 = arith.subf %24, %25 : vector<8x1xf32>
    %32 = math.exp %31 : vector<8x1xf32>
    %c0_14 = arith.constant 0 : index
    %c0_15 = arith.constant 0 : index
    %33 = vector.load %arg6[%c0_14, %c0_15] : memref<8x1xf32, #tpu.memory_space<vmem>>, vector<8x1xf32>
    %34 = arith.mulf %32, %33 : vector<8x1xf32>
    %cst_16 = arith.constant dense<0.000000e+00> : vector<8xf32>
    %35 = vector.multi_reduction <add>, %30, %cst_16 [1] : vector<8x128xf32> to vector<8xf32>
    %36 = vector.shape_cast %35 : vector<8xf32> to vector<8x1xf32>
    %37 = arith.addf %34, %36 : vector<8x1xf32>
    %c0_17 = arith.constant 0 : index
    %c0_18 = arith.constant 0 : index
    %38 = vector.load %arg6[%c0_17, %c0_18] : memref<8x1xf32, #tpu.memory_space<vmem>>, vector<8x1xf32>
    tpu.vector_store %arg6[%c0_17, %c0_18], %37 {strides = array<i32>} : memref<8x1xf32, #tpu.memory_space<vmem>>, vector<8x1xf32>,
    %c0_19 = arith.constant 0 : index
    %c0_20 = arith.constant 0 : index
    %39 = vector.load %arg5[%c0_19, %c0_20] : memref<8x1xf32, #tpu.memory_space<vmem>>, vector<8x1xf32>
    tpu.vector_store %arg5[%c0_19, %c0_20], %25 {strides = array<i32>} : memref<8x1xf32, #tpu.memory_space<vmem>>, vector<8x1xf32>,
    %c0_i32_21 = arith.constant 0 : i32
    %40 = arith.cmpi eq, %arg1, %c0_i32_21 : i32
    %41 = arith.extui %40 : i1 to i32
    %c0_i32_22 = arith.constant 0 : i32
    %42 = arith.cmpi ne, %41, %c0_i32_22 : i32
    scf.if %42 {
      %c0_23 = arith.constant 0 : index
      %c0_24 = arith.constant 0 : index
      %43 = vector.load %arg5[%c0_23, %c0_24] : memref<8x1xf32, #tpu.memory_space<vmem>>, vector<8x1xf32>
      %c0_25 = arith.constant 0 : index
      %c0_26 = arith.constant 0 : index
      %44 = vector.load %arg6[%c0_25, %c0_26] : memref<8x1xf32, #tpu.memory_space<vmem>>, vector<8x1xf32>
      %45 = math.log %44 : vector<8x1xf32>
      %46 = arith.addf %43, %45 : vector<8x1xf32>
      %c0_27 = arith.constant 0 : index
      %c0_28 = arith.constant 0 : index
      %47 = vector.load %arg7[%c0_27, %c0_28] : memref<8x1xf32, #tpu.memory_space<vmem>>, vector<8x1xf32>
      %48 = arith.subf %46, %47 : vector<8x1xf32>
      %c0_29 = arith.constant 0 : index
      %c0_30 = arith.constant 0 : index
      %49 = vector.load %arg4[%c0_29, %c0_30] : memref<8x1xf32, #tpu.memory_space<vmem>>, vector<8x1xf32>
      tpu.vector_store %arg4[%c0_29, %c0_30], %48 {strides = array<i32>} : memref<8x1xf32, #tpu.memory_space<vmem>>, vector<8x1xf32>,
    } else {
    }
    return
  }
  func.func @transform_0(%arg0: i32, %arg1: i32) -> (i32, i32) {
    %c0_i32 = arith.constant 0 : i32
    return %arg0, %arg1 : i32, i32
  }
  func.func @transform_1(%arg0: i32, %arg1: i32) -> (i32, i32) {
    %c0_i32 = arith.constant 0 : i32
    %c0_i32_0 = arith.constant 0 : i32
    return %arg0, %c0_i32 : i32, i32
  }
  func.func @transform_2(%arg0: i32, %arg1: i32) -> (i32, i32) {
    %c0_i32 = arith.constant 0 : i32
    %c0_i32_0 = arith.constant 0 : i32
    return %arg0, %c0_i32 : i32, i32
  }
}

</mosaic_0001>

<llo_original>
// kernel: tpu_custom_call.1
$region0: #{tpu_custom_call.1}
  #allocation0 [shape = 'u32[]', space=smem, size = 0x4, offset = 0x4, fixed_abs, tag = 'smem constant byte address 0x4 - core index']
  #allocation1 [shape = 'u32[144,128]{1,0:T(1,128)}', space=vmem, size = 0x12000, scoped, tag = 'internal scratch']
  #allocation2 [shape = 'f32[8,1]{1,0:T(8,128)}', space=vmem, size = 0x1000, scoped, tag = 'scratch operand']
  #allocation3 [shape = 'f32[8,1]{1,0:T(8,128)}', space=vmem, size = 0x1000, scoped, tag = 'scratch operand']
  #allocation4 [shape = 'f32[8,1]{1,0:T(8,128)}', space=vmem, size = 0x1000, scoped, tag = 'scratch operand']
  %s0 = inlined_call_operand.vmem [shape: f32[8,32], index: 0, kind: input, shape index: {}]
  %s1 = inlined_call_operand.vmem [shape: s32[8,1], index: 1, kind: input, shape index: {}]
  %s2 = inlined_call_operand.vmem [shape: f32[8,1], index: 2, kind: output, shape index: {}]
  %s3 = sld [smem:[#allocation0]]
  $region26: #{tpu_custom_call.1} parent=0
    _
  %s5 = ssub.s32 1, %s3
  %s6 = scalar_select 0, %s5, %s3
  // Predicated region
  $region2: #{tpu_custom_call.1} parent=0 // pred_check
    _
  $region3: #{tpu_custom_call.1} parent=0 // pred_check_branch
    %8 = sbr.rel (0) target = $region5
  $region4: #{tpu_custom_call.1} parent=0 // pred_region
    _
  $region5: #{tpu_custom_call.1} parent=0 // pred_fallthru
    _
  // Predicated region
  $region6: #{tpu_custom_call.1} parent=0 // pred_check
    _
  $region7: #{tpu_custom_call.1} parent=0 // pred_check_branch
    %10 = sbr.rel (0) target = $region9
  $region8: #{tpu_custom_call.1} parent=0 // pred_region
    _
  $region9: #{tpu_custom_call.1} parent=0 // pred_fallthru
    _
  %p11 = scmp.eq.s32.totalorder 0, 0
  // Predicated region
  $region10: #{tpu_custom_call.1} parent=0 // pred_check
    %p12 = pneg %p11
  $region11: #{tpu_custom_call.1} parent=0 // pred_check_branch
    %14 = sbr.rel (%p12) target = $region13
  $region12: #{tpu_custom_call.1} parent=0 // pred_region
    %vm15 = vcmask 7168
    %16 = vst.msk [vmem:[#allocation2] sm:$0xff] %vm15, -inf
    %17 = vst.msk [vmem:[#allocation3] sm:$0xff] %vm15, 0.0
    %18 = vst.msk [vmem:[#allocation4] sm:$0xff] %vm15, 0.0
  $region13: #{tpu_custom_call.1} parent=0 // pred_fallthru
    _
  %v19 = vld [vmem:[%s0] sm:$0xff]
  %v20 = vlaneseq
  %v21 = vand.u32 %v20, 127
  %v22 = vld [vmem:[%s1] sm:$0xff]
  %s23 = smul.u32 0, 128
  %v24 = vstv %s23
  %v25 = vsub.s32 %v22, %v24
  %v26 = vld [vmem:[#allocation4] sm:$0xff]
  %27 = vset.pattern.permute.xlu0 0
  %28 = vperm.xlu0 %27, %v25
  %v29 = vpop.permute.xlu0 %28
  %vm30 = vcmp.eq.s32.totalorder %v21, %v29
  %v31 = vsel %vm30, %v19, 0.0
  %32 = vadd.xlane.f32.xlu0 %v31
  %v33 = vpop.xlane.xlu0 %32
  %v34 = vadd.f32 %v26, %v33
  %vm35 = vcmask 7168
  %36 = vst.msk [vmem:[#allocation4] sm:$0xff] %vm35, %v34
  %vm37 = vcmp.lt.s32.totalorder %v21, 32
  %v38 = vsel %vm37, %v19, -inf
  %39 = vmax.xlane.f32.xlu0 %v38
  %v40 = vpop.xlane.xlu0 %39
  %v41 = vld [vmem:[#allocation2] sm:$0xff]
  %v42 = vmax.f32 %v41, %v40
  %44 = vset.pattern.permute.xlu0 0
  %45 = vperm.xlu0 %44, %v42
  %v46 = vpop.permute.xlu0 %45
  %v48 = vsub.f32 %v19, %v46
  %v49 = vmul.f32 %v48, 1.442695
  %v50 = vpow.pop %v49
  %v51 = vsel %vm37, %v50, 0.0
  %v52 = vsub.f32 %v41, %v42
  %v53 = vmul.f32 %v52, 1.442695
  %v54 = vpow.pop %v53
  %v55 = vld [vmem:[#allocation3] sm:$0xff]
  %v56 = vmul.f32 %v54, %v55
  %57 = vadd.xlane.f32.xlu0 %v51
  %v58 = vpop.xlane.xlu0 %57
  %v59 = vadd.f32 %v56, %v58
  %60 = vst.msk [vmem:[#allocation3] sm:$0xff] %vm35, %v59
  %61 = vst.msk [vmem:[#allocation2] sm:$0xff] %vm35, %v42
  // Predicated region
  $region14: #{tpu_custom_call.1} parent=0 // pred_check
    %p62 = pneg %p11
  $region15: #{tpu_custom_call.1} parent=0 // pred_check_branch
    %64 = sbr.rel (%p62) target = $region17
  $region16: #{tpu_custom_call.1} parent=0 // pred_region
    %v65 = vld [vmem:[#allocation2] sm:$0xff]
    %v66 = vld [vmem:[#allocation3] sm:$0xff]
    %v67 = vlog2.pop %v66
    %v68 = vmul.f32 %v67, 0.6931472
    %v69 = vadd.f32 %v65, %v68
    %v70 = vld [vmem:[#allocation4] sm:$0xff]
    %v71 = vsub.f32 %v69, %v70
    %72 = vst.msk [vmem:[%s2] sm:$0xff] %vm35, %v71
  $region17: #{tpu_custom_call.1} parent=0 // pred_fallthru
    _
  // Predicated region
  $region18: #{tpu_custom_call.1} parent=0 // pred_check
    _
  $region19: #{tpu_custom_call.1} parent=0 // pred_check_branch
    %74 = sbr.rel (0) target = $region21
  $region20: #{tpu_custom_call.1} parent=0 // pred_region
    _
  $region21: #{tpu_custom_call.1} parent=0 // pred_fallthru
    _
  // Predicated region
  $region22: #{tpu_custom_call.1} parent=0 // pred_check
    _
  $region23: #{tpu_custom_call.1} parent=0 // pred_check_branch
    %76 = sbr.rel (0) target = $region25
  $region24: #{tpu_custom_call.1} parent=0 // pred_region
    _
  $region25: #{tpu_custom_call.1} parent=0 // pred_fallthru
    _

</llo_original>
